<compile_context>
chip_gen: v6e
topology: v6e:2x2x1
jax: 0.10.0
libtpu: 0.0.40
codegen_flags: <defaults>
</compile_context>

<pallas_src>
import jax
import jax.numpy as jnp
from jax.experimental import pallas as pl
from jax.experimental.pallas import tpu as pltpu


def _lora_kernel(x_ref, w_ref, b_ref, a_ref, wb_ref, o_ref, acc_ref):
    """One (i, j, k) grid step.

    x_ref  : (tm, tk)        activation tile (compute dtype, e.g. bf16)
    w_ref  : (tk, tn)        base weight tile, pre-transposed to (d_in, d_out)
    b_ref  : (1, tn)    f32  bias tile
    a_ref  : (tm, r_pad)     hoisted LoRA intermediate  a = x @ Wa^T
    wb_ref : (r_pad, tn)     LoRA-B tile, pre-transposed with (alpha // r) folded in
    o_ref  : (tm, tn)        output tile
    acc_ref: (tm, tn)   f32  accumulator scratch (lives across the k axis)
    """
    k = pl.program_id(2)

    @pl.when(k == 0)
    def _init():
        acc_ref[...] = jnp.zeros_like(acc_ref)

    # Base GEMM: x @ W^T, accumulated over K tiles in f32 on the MXU.
    acc_ref[...] += jnp.dot(x_ref[...], w_ref[...],
                            preferred_element_type=jnp.float32)

    @pl.when(k == pl.num_programs(2) - 1)
    def _finalize():
        # LoRA B: a @ (scale * W_b)^T -- one small matmul in the epilogue only.
        lora = jnp.dot(a_ref[...], wb_ref[...],
                       preferred_element_type=jnp.float32)
        o_ref[...] = (acc_ref[...] + b_ref[...] + lora).astype(o_ref.dtype)


def prepare_lora_weights(w, b, w_a, w_b, r, alpha, compute_dtype=jnp.bfloat16):
    """One-time weight prep (outside the per-call hot path).

    * transposes W -> (d_in, d_out), W_a -> (d_in, r_pad), W_b -> (r_pad, d_out)
      so the kernel runs standard [M,K]x[K,N] dots (no per-tile layout shuffle),
    * folds the integer LoRA scale (alpha // r) into W_b,
    * zero-pads the rank dim to a multiple of 128 (lane-dense, full MXU K-depth),
    * casts weights to the (bf16) compute dtype; bias stays f32.
    """
    scale = alpha // r  # PyTorch `alpha // r` semantics (becomes 0 if alpha < r)
    w = jnp.asarray(w)
    w_a = jnp.asarray(w_a)
    w_b = jnp.asarray(w_b)
    d_out, d_in = w.shape
    r_pad = max(128, pl.cdiv(r, 128) * 128)

    wt = w.T.astype(compute_dtype)                                       # (d_in, d_out)
    wa_t = jnp.zeros((d_in, r_pad), compute_dtype)
    wa_t = wa_t.at[:, :r].set(w_a.T.astype(compute_dtype))               # (d_in, r_pad)
    wb_scaled = w_b * jnp.asarray(scale, w_b.dtype)
    wb_t = jnp.zeros((r_pad, d_out), compute_dtype)
    wb_t = wb_t.at[:r, :].set(wb_scaled.T.astype(compute_dtype))         # (r_pad, d_out)
    b2 = jnp.asarray(b).reshape(1, d_out).astype(jnp.float32)
    return wt, b2, wa_t, wb_t


def _round_up(x, m):
    return ((x + m - 1) // m) * m


def _pick_tile(dim, target, granule):
    """Largest t <= target with t % granule == 0 and dim % t == 0, else full dim."""
    if dim <= target:
        return dim
    t = (target // granule) * granule
    while t >= granule:
        if dim % t == 0:
            return t
        t -= granule
    # TODO(synk): for very large d_in/d_out not divisible by 128, pad the weight
    # dims at prep time instead of falling back to the full extent (VMEM hazard).
    return dim


def lora_forward(x, wt, b2, wa_t, wb_t, *,
                 tm_target=512, tn_target=512, tk_target=1024):
    """x: (..., d_in). wt: (d_in, d_out); b2: (1, d_out) f32; wa_t: (d_in, r_pad);
    wb_t: (r_pad, d_out) with (alpha // r) folded in.  Returns (..., d_out) in x.dtype."""
    d_in, d_out = wt.shape
    r_pad = wb_t.shape[0]
    lead = x.shape[:-1]
    x2 = x.reshape(-1, d_in)
    M = x2.shape[0]
    compute_dtype = wt.dtype
    out_dtype = x.dtype

    # Sublane granule of the M axis follows the packed compute dtype.
    citm = jnp.dtype(compute_dtype).itemsize
    tm_granule = {4: 8, 2: 16, 1: 32}.get(citm, 8)

    # Round M up (zero-pad) so tiles always divide cleanly -- never fall back to
    # an arbitrary full extent.
    m_rounded = _round_up(M, tm_granule)
    tm = min(tm_target, m_rounded)
    m_pad = _round_up(m_rounded, tm)

    tn = _pick_tile(d_out, tn_target, 128)
    tk = _pick_tile(d_in, tk_target, 128)

    # v7x megacore: keep at least two independent (i, j) tiles when possible;
    # for decode-size M prefer splitting d_out rather than M.
    if (m_pad // tm) * (d_out // tn) < 2 and d_out // tn == 1 and d_out >= 256:
        tn_half = _pick_tile(d_out, max(128, tn // 2), 128)
        if d_out // tn_half >= 2:
            tn = tn_half

    x_c = x2.astype(compute_dtype)
    # Hoisted LoRA-A matmul: computed ONCE per call (tiny XLA matmul), not per
    # output tile inside the grid.  f32 accumulation, then cast to compute dtype.
    a = jnp.dot(x_c, wa_t, preferred_element_type=jnp.float32).astype(compute_dtype)
    if m_pad != M:
        x_c = jnp.pad(x_c, ((0, m_pad - M), (0, 0)))
        a = jnp.pad(a, ((0, m_pad - M), (0, 0)))

    grid = (m_pad // tm, d_out // tn, d_in // tk)

    # Double-buffered working set + f32 accumulator scratch; keep well under the
    # v7x 64 MiB VMEM (scoped defaults: 32 MiB v6e/v7x, 16 MiB v5e).
    oitm = jnp.dtype(out_dtype).itemsize
    working_set = 2 * (tm * tk * citm + tk * tn * citm + tn * 4
                       + tm * r_pad * citm + r_pad * tn * citm
                       + tm * tn * oitm) + tm * tn * 4
    vmem_limit = int(min(max(2 * working_set, 32 << 20), 48 << 20))

    flops = 2 * m_pad * d_in * d_out + 2 * m_pad * r_pad * d_out
    bytes_accessed = (
        m_pad * d_in * citm * grid[1]          # x streamed once per N tile
        + d_in * d_out * citm * grid[0]        # W streamed once per M tile
        + m_pad * r_pad * citm * grid[1]       # a streamed once per N tile
        + r_pad * d_out * citm * grid[0]       # W_b streamed once per M tile
        + d_out * 4 * grid[0]                  # bias
        + m_pad * d_out * oitm)                # output written once

    out = pl.pallas_call(
        _lora_kernel,
        out_shape=jax.ShapeDtypeStruct((m_pad, d_out), out_dtype),
        grid_spec=pltpu.PrefetchScalarGridSpec(
            num_scalar_prefetch=0,
            grid=grid,
            in_specs=[
                pl.BlockSpec((tm, tk), lambda i, j, k: (i, k)),      # x
                pl.BlockSpec((tk, tn), lambda i, j, k: (k, j)),      # W (pre-transposed)
                pl.BlockSpec((1, tn), lambda i, j, k: (0, j)),       # bias
                pl.BlockSpec((tm, r_pad), lambda i, j, k: (i, 0)),   # a = x @ Wa^T (hoisted)
                pl.BlockSpec((r_pad, tn), lambda i, j, k: (0, j)),   # scaled Wb (pre-transposed)
            ],
            out_specs=pl.BlockSpec((tm, tn), lambda i, j, k: (i, j)),
            scratch_shapes=[pltpu.VMEM((tm, tn), jnp.float32)]),
        compiler_params=pltpu.CompilerParams(
            dimension_semantics=("parallel", "parallel", "arbitrary"),
            vmem_limit_bytes=vmem_limit),
        cost_estimate=pl.CostEstimate(flops=flops, transcendentals=0,
                                      bytes_accessed=bytes_accessed),
    )(x_c, wt, b2, a, wb_t)

    return out[:M].reshape(*lead, d_out)


def _ref_forward_bf16(x2, w, b, w_a, w_b, r, alpha, compute_dtype):
    """Pure-JAX reference with the same bf16-compute / f32-accumulate semantics."""
    f32 = jnp.float32
    scale = alpha // r
    xc = x2.astype(compute_dtype).astype(f32)
    wc = jnp.asarray(w).astype(compute_dtype).astype(f32)
    wac = jnp.asarray(w_a).astype(compute_dtype).astype(f32)
    wbc = (jnp.asarray(w_b) * scale).astype(compute_dtype).astype(f32)
    a = (xc @ wac.T).astype(compute_dtype).astype(f32)
    return (xc @ wc.T + b + a @ wbc.T).astype(x2.dtype)


if __name__ == "__main__":
    # Shapes consistent with the module: batch=2, seq=8, hidden d_in=d_out=32,
    # rank r=4, alpha=8 -> scale = alpha // r = 2.
    batch, seq, d_in, d_out, r, alpha = 2, 8, 32, 32, 4, 8

    key = jax.random.PRNGKey(0)
    kx, kw, kb, ka, kkb = jax.random.split(key, 5)
    x = jax.random.normal(kx, (batch, seq, d_in), dtype=jnp.float32)
    w = jax.random.normal(kw, (d_out, d_in), dtype=jnp.float32) * 0.1    # base weight
    b = jax.random.normal(kb, (d_out,), dtype=jnp.float32) * 0.1         # base bias
    w_a = jax.random.normal(ka, (r, d_in), dtype=jnp.float32) * 0.1      # LoRA A
    w_b = jax.random.normal(kkb, (d_out, r), dtype=jnp.float32) * 0.1    # LoRA B

    wt, b2, wa_t, wb_t = prepare_lora_weights(w, b, w_a, w_b, r, alpha)
    out = jax.block_until_ready(lora_forward(x, wt, b2, wa_t, wb_t))
    assert out.shape == (batch, seq, d_out)

    x_flat = x.reshape(-1, d_in)
    ref_bf16 = _ref_forward_bf16(x_flat, w, b, w_a, w_b, r, alpha,
                                 jnp.bfloat16).reshape(batch, seq, d_out)
    ref_f32 = (x_flat @ w.T + b
               + (alpha // r) * ((x_flat @ w_a.T) @ w_b.T)).reshape(batch, seq, d_out)
    assert jnp.allclose(out, ref_bf16, atol=1e-2, rtol=1e-2), "bf16-consistent mismatch"
    assert jnp.allclose(out, ref_f32, atol=5e-2, rtol=5e-2), "f32-reference mismatch"

    # Secondary check: real multi-tile grid (K accumulation, multiple N tiles,
    # and the M zero-padding path with a non-aligned token count).
    M2, din2, dout2, r2, alpha2 = 389, 2048, 1024, 8, 16
    k2 = jax.random.split(jax.random.PRNGKey(1), 5)
    x2 = jax.random.normal(k2[0], (M2, din2), dtype=jnp.float32)
    w2 = jax.random.normal(k2[1], (dout2, din2), dtype=jnp.float32) * 0.02
    bb2 = jax.random.normal(k2[2], (dout2,), dtype=jnp.float32) * 0.02
    wa2 = jax.random.normal(k2[3], (r2, din2), dtype=jnp.float32) * 0.02
    wb2 = jax.random.normal(k2[4], (dout2, r2), dtype=jnp.float32) * 0.02

    wt2, b22, wa_t2, wb_t2 = prepare_lora_weights(w2, bb2, wa2, wb2, r2, alpha2)
    out2 = jax.block_until_ready(lora_forward(x2, wt2, b22, wa_t2, wb_t2))
    ref2 = _ref_forward_bf16(x2, w2, bb2, wa2, wb2, r2, alpha2, jnp.bfloat16)
    assert out2.shape == (M2, dout2)
    assert jnp.allclose(out2, ref2, atol=2e-2, rtol=2e-2), "tiled-shape mismatch"

    print("KERNEL_OK")
</pallas_src>

<mosaic_0001>
module attributes {stable_mosaic.version = 11 : i64} {
  func.func @_lora_kernel(%arg0: i32, %arg1: i32, %arg2: i32, %arg3: memref<16x32xbf16, #tpu.memory_space<vmem>>, %arg4: memref<32x32xbf16, #tpu.memory_space<vmem>>, %arg5: memref<1x32xf32, #tpu.memory_space<vmem>>, %arg6: memref<16x128xbf16, #tpu.memory_space<vmem>>, %arg7: memref<128x32xbf16, #tpu.memory_space<vmem>>, %arg8: memref<16x32xf32, #tpu.memory_space<vmem>>, %arg9: memref<16x32xf32, #tpu.memory_space<vmem>>) attributes {dimension_semantics = [#tpu.dimension_semantics<parallel>, #tpu.dimension_semantics<parallel>, #tpu.dimension_semantics<arbitrary>], iteration_bounds = array<i64: 1, 1, 1>, scalar_prefetch = 0 : i64, scratch_operands = 1 : i64, tpu.core_type = #tpu.core_type<tc>, window_params = [{transform_indices = @transform_0, window_bounds = array<i64: 16, 32>}, {transform_indices = @transform_1, window_bounds = array<i64: 32, 32>}, {transform_indices = @transform_2, window_bounds = array<i64: 1, 32>}, {transform_indices = @transform_3, window_bounds = array<i64: 16, 128>}, {transform_indices = @transform_4, window_bounds = array<i64: 128, 32>}, {transform_indices = @transform_5, window_bounds = array<i64: 16, 32>}]} {
    %c0_i32 = arith.constant 0 : i32
    %0 = arith.cmpi eq, %arg2, %c0_i32 : i32
    %1 = arith.extui %0 : i1 to i32
    %c0_i32_0 = arith.constant 0 : i32
    %2 = arith.cmpi ne, %1, %c0_i32_0 : i32
    scf.if %2 {
      %cst_10 = arith.constant 0.000000e+00 : f32
      %12 = vector.broadcast %cst_10 : f32 to vector<16x32xf32>
      %c0_11 = arith.constant 0 : index
      %c0_12 = arith.constant 0 : index
      %13 = vector.load %arg9[%c0_11, %c0_12] : memref<16x32xf32, #tpu.memory_space<vmem>>, vector<16x32xf32>
      tpu.vector_store %arg9[%c0_11, %c0_12], %12 {strides = array<i32>} : memref<16x32xf32, #tpu.memory_space<vmem>>, vector<16x32xf32>,
    } else {
    }
    %c0 = arith.constant 0 : index
    %c0_1 = arith.constant 0 : index
    %3 = vector.load %arg9[%c0, %c0_1] : memref<16x32xf32, #tpu.memory_space<vmem>>, vector<16x32xf32>
    %c0_2 = arith.constant 0 : index
    %c0_3 = arith.constant 0 : index
    %4 = vector.load %arg3[%c0_2, %c0_3] : memref<16x32xbf16, #tpu.memory_space<vmem>>, vector<16x32xbf16>
    %c0_4 = arith.constant 0 : index
    %c0_5 = arith.constant 0 : index
    %5 = vector.load %arg4[%c0_4, %c0_5] : memref<32x32xbf16, #tpu.memory_space<vmem>>, vector<32x32xbf16>
    %cst = arith.constant dense<0.000000e+00> : vector<16x32xf32>
    %6 = tpu.matmul %4, %5, %cst {dimension_numbers = #tpu.dot_dimension_numbers<[1], [0], [0], [1], [0, 0, 1, 1], [], []>} : vector<16x32xbf16>, vector<32x32xbf16>, vector<16x32xf32> -> vector<16x32xf32>
    %7 = arith.addf %3, %6 : vector<16x32xf32>
    %c0_6 = arith.constant 0 : index
    %c0_7 = arith.constant 0 : index
    %8 = vector.load %arg9[%c0_6, %c0_7] : memref<16x32xf32, #tpu.memory_space<vmem>>, vector<16x32xf32>
    tpu.vector_store %arg9[%c0_6, %c0_7], %7 {strides = array<i32>} : memref<16x32xf32, #tpu.memory_space<vmem>>, vector<16x32xf32>,
    %c0_i32_8 = arith.constant 0 : i32
    %9 = arith.cmpi eq, %arg2, %c0_i32_8 : i32
    %10 = arith.extui %9 : i1 to i32
    %c0_i32_9 = arith.constant 0 : i32
    %11 = arith.cmpi ne, %10, %c0_i32_9 : i32
    scf.if %11 {
      %c0_10 = arith.constant 0 : index
      %c0_11 = arith.constant 0 : index
      %12 = vector.load %arg6[%c0_10, %c0_11] : memref<16x128xbf16, #tpu.memory_space<vmem>>, vector<16x128xbf16>
      %c0_12 = arith.constant 0 : index
      %c0_13 = arith.constant 0 : index
      %13 = vector.load %arg7[%c0_12, %c0_13] : memref<128x32xbf16, #tpu.memory_space<vmem>>, vector<128x32xbf16>
      %cst_14 = arith.constant dense<0.000000e+00> : vector<16x32xf32>
      %14 = tpu.matmul %12, %13, %cst_14 {dimension_numbers = #tpu.dot_dimension_numbers<[1], [0], [0], [1], [0, 0, 1, 1], [], []>} : vector<16x128xbf16>, vector<128x32xbf16>, vector<16x32xf32> -> vector<16x32xf32>
      %c0_15 = arith.constant 0 : index
      %c0_16 = arith.constant 0 : index
      %15 = vector.load %arg9[%c0_15, %c0_16] : memref<16x32xf32, #tpu.memory_space<vmem>>, vector<16x32xf32>
      %c0_17 = arith.constant 0 : index
      %c0_18 = arith.constant 0 : index
      %16 = vector.load %arg5[%c0_17, %c0_18] : memref<1x32xf32, #tpu.memory_space<vmem>>, vector<1x32xf32>
      %17 = vector.broadcast %16 : vector<1x32xf32> to vector<16x32xf32>
      %18 = arith.addf %15, %17 : vector<16x32xf32>
      %19 = arith.addf %18, %14 : vector<16x32xf32>
      %c0_19 = arith.constant 0 : index
      %c0_20 = arith.constant 0 : index
      %20 = vector.load %arg8[%c0_19, %c0_20] : memref<16x32xf32, #tpu.memory_space<vmem>>, vector<16x32xf32>
      tpu.vector_store %arg8[%c0_19, %c0_20], %19 {strides = array<i32>} : memref<16x32xf32, #tpu.memory_space<vmem>>, vector<16x32xf32>,
    } else {
    }
    return
  }
  func.func @transform_0(%arg0: i32, %arg1: i32, %arg2: i32) -> (i32, i32) {
    %c0_i32 = arith.constant 0 : i32
    return %arg0, %arg2 : i32, i32
  }
  func.func @transform_1(%arg0: i32, %arg1: i32, %arg2: i32) -> (i32, i32) {
    %c0_i32 = arith.constant 0 : i32
    return %arg2, %arg1 : i32, i32
  }
  func.func @transform_2(%arg0: i32, %arg1: i32, %arg2: i32) -> (i32, i32) {
    %c0_i32 = arith.constant 0 : i32
    %c0_i32_0 = arith.constant 0 : i32
    return %c0_i32, %arg1 : i32, i32
  }
  func.func @transform_3(%arg0: i32, %arg1: i32, %arg2: i32) -> (i32, i32) {
    %c0_i32 = arith.constant 0 : i32
    %c0_i32_0 = arith.constant 0 : i32
    return %arg0, %c0_i32 : i32, i32
  }
  func.func @transform_4(%arg0: i32, %arg1: i32, %arg2: i32) -> (i32, i32) {
    %c0_i32 = arith.constant 0 : i32
    %c0_i32_0 = arith.constant 0 : i32
    return %c0_i32, %arg1 : i32, i32
  }
  func.func @transform_5(%arg0: i32, %arg1: i32, %arg2: i32) -> (i32, i32) {
    %c0_i32 = arith.constant 0 : i32
    return %arg0, %arg1 : i32, i32
  }
}

</mosaic_0001>

<llo_original>
// kernel: tpu_custom_call.1
$region0: #{tpu_custom_call.1}
  #allocation0 [shape = 'u32[]', space=smem, size = 0x4, offset = 0x4, fixed_abs, tag = 'smem constant byte address 0x4 - core index']
  #allocation1 [shape = 'u32[144,128]{1,0:T(1,128)}', space=vmem, size = 0x12000, scoped, tag = 'internal scratch']
  #allocation2 [shape = 'f32[16,32]{1,0:T(8,128)}', space=vmem, size = 0x2000, scoped, tag = 'scratch operand']
  %s0 = inlined_call_operand.vmem [shape: bf16[16,32], index: 0, kind: input, shape index: {}]
  %s1 = inlined_call_operand.vmem [shape: bf16[32,32], index: 1, kind: input, shape index: {}]
  %s2 = inlined_call_operand.vmem [shape: f32[1,32], index: 2, kind: input, shape index: {}]
  %s3 = inlined_call_operand.vmem [shape: bf16[16,128], index: 3, kind: input, shape index: {}]
  %s4 = inlined_call_operand.vmem [shape: bf16[128,32], index: 4, kind: input, shape index: {}]
  %s5 = inlined_call_operand.hbm [shape: f32[16,32], index: 5, kind: output, shape index: {}]
  %s6 = sld [smem:[#allocation0]]
  $region38: #{tpu_custom_call.1} parent=0
    _
  %s8 = ssub.s32 1, %s6
  %s9 = scalar_select 0, %s8, %s6
  $region1: #{tpu_custom_call.1} parent=0
    #allocation3 [shape = 'u8[8192]{0}', space=vmem, size = 0x2000, scoped, tag = 'output window, operand 0, single buffered']
    #allocation4 [shape = 's32[1]{0}', space=sflag, size = 0x4, scoped, tag = 'scoped memory for tpu_custom_call.1']
    %10 = vsyncpa [#allocation4], 0
    // Predicated region
    $region2: #{tpu_custom_call.1} parent=1 // pred_check
      _
    $region3: #{tpu_custom_call.1} parent=1 // pred_check_branch
      %12 = sbr.rel (0) target = $region5
    $region4: #{tpu_custom_call.1} parent=1 // pred_region
      _
    $region5: #{tpu_custom_call.1} parent=1 // pred_fallthru
      _
    // Predicated region
    $region6: #{tpu_custom_call.1} parent=1 // pred_check
      _
    $region7: #{tpu_custom_call.1} parent=1 // pred_check_branch
      %14 = sbr.rel (0) target = $region9
    $region8: #{tpu_custom_call.1} parent=1 // pred_region
      _
    $region9: #{tpu_custom_call.1} parent=1 // pred_fallthru
      _
    // Predicated region
    $region10: #{tpu_custom_call.1} parent=1 // pred_check
      _
    $region11: #{tpu_custom_call.1} parent=1 // pred_check_branch
      %16 = sbr.rel (0) target = $region13
    $region12: #{tpu_custom_call.1} parent=1 // pred_region
      _
    $region13: #{tpu_custom_call.1} parent=1 // pred_fallthru
      _
    // Predicated region
    $region14: #{tpu_custom_call.1} parent=1 // pred_check
      _
    $region15: #{tpu_custom_call.1} parent=1 // pred_check_branch
      %18 = sbr.rel (0) target = $region17
    $region16: #{tpu_custom_call.1} parent=1 // pred_region
      _
    $region17: #{tpu_custom_call.1} parent=1 // pred_fallthru
      _
    // Predicated region
    $region18: #{tpu_custom_call.1} parent=1 // pred_check
      _
    $region19: #{tpu_custom_call.1} parent=1 // pred_check_branch
      %20 = sbr.rel (0) target = $region21
    $region20: #{tpu_custom_call.1} parent=1 // pred_region
      _
    $region21: #{tpu_custom_call.1} parent=1 // pred_fallthru
      _
    %p22 = scmp.eq.s32.totalorder 0, 0
    // Predicated region
    $region22: #{tpu_custom_call.1} parent=1 // pred_check
      %p23 = pneg %p22
    $region23: #{tpu_custom_call.1} parent=1 // pred_check_branch
      %25 = sbr.rel (%p23) target = $region25
    $region24: #{tpu_custom_call.1} parent=1 // pred_region
      %vm26 = vcmask 261120
      %27 = vst.msk [vmem:[#allocation2] sm:$0xff] %vm26, 0.0
      %28 = vst.msk [vmem:[#allocation2 + $0x8] sm:$0xff] %vm26, 0.0
    $region25: #{tpu_custom_call.1} parent=1 // pred_fallthru
      _
    %v29 = vld [vmem:[#allocation2] sm:$0xff]
    %v30 = vld [vmem:[#allocation2 + $0x8] sm:$0xff]
    %v31 = vld [vmem:[%s0] sm:$0xf]
    %v32 = vld [vmem:[%s0 + $0x4] sm:$0xf]
    %v33 = vld [vmem:[%s1] sm:$0xf]
    %v34 = vld [vmem:[%s1 + $0x4] sm:$0xf]
    %v35 = vld [vmem:[%s1 + $0x8] sm:$0xf]
    %v36 = vld [vmem:[%s1 + $0xc] sm:$0xf]
    %v39 = vunpack.c.l.b16 %v31
    %v40 = vunpack.c.l.b16 %v32
    %v41 = vpack.c.b16 %v40, %v39
    %v46 = vunpack.c.l.b16 %v33
    %v47 = vunpack.c.l.b16 %v34
    %v48 = vunpack.c.l.b16 %v35
    %v49 = vunpack.c.l.b16 %v36
    %v50 = vpack.c.b16 %v47, %v46
    %v51 = vpack.c.b16 %v49, %v48
    %vm54 = vcmask 261120
    %v56 = vsel %vm54, %v41, 0
    %58 = vmatprep.subr.bf16.mxu0 0
    %59 = vmatpush1.bf16.msra.mxu0 0
    %60 = vmatprep.subr.bf16.mxu0 0
    %61 = vmatpush1.bf16.msra.mxu0 0
    %62 = vmatprep.subr.bf16.mxu0 0
    %63 = vmatpush1.bf16.msra.mxu0 0
    %64 = vmatprep.subr.bf16.mxu0 0
    %65 = vmatpush1.bf16.msra.mxu0 0
    %66 = vmatprep.subr.bf16.mxu0 0
    %67 = vmatpush1.bf16.msra.mxu0 0
    %68 = vmatprep.subr.bf16.mxu0 0
    %69 = vmatpush1.bf16.msra.mxu0 0
    %70 = vmatprep.subr.bf16.mxu0 0
    %71 = vmatpush1.bf16.msra.mxu0 %v51
    %72 = vmatprep.subr.bf16.mxu0 0
    %73 = vmatpush1.bf16.msra.mxu0 %v50
    %74 = vmatprep.subr.bf16.mxu0 0
    %75 = vmatpush2.bf16.msra.mxu0 0
    %76 = vmatprep.subr.bf16.mxu0 0
    %77 = vmatpush2.bf16.msra.mxu0 0
    %78 = vmatprep.subr.bf16.mxu0 0
    %79 = vmatpush2.bf16.msra.mxu0 0
    %80 = vmatprep.subr.bf16.mxu0 0
    %81 = vmatpush2.bf16.msra.mxu0 0
    %82 = vmatprep.subr.bf16.mxu0 0
    %83 = vmatpush2.bf16.msra.mxu0 0
    %84 = vmatprep.subr.bf16.mxu0 0
    %85 = vmatpush2.bf16.msra.mxu0 0
    %86 = vmatprep.subr.bf16.mxu0 0
    %87 = vmatpush2.bf16.msra.mxu0 0
    %88 = vmatprep.subr.bf16.mxu0 0
    %89 = vmatpush2.bf16.msra.mxu0 0
    %90 = vmatprep.mubr.bf16.mxu0 0
    %91 = vmatmul.mubr.bf16.gmra.mxu0 %v56
    %v92 = vpop.f32.mrf.mxu0
    %v93 = vadd.f32 0.0, %v92
    %v94 = vpop.f32.mrf.mxu0
    %v95 = vpop.f32.mrf.mxu0
    %v96 = vadd.f32 0.0, %v95
    %v97 = vpop.f32.mrf.mxu0
    %98 = vdwg.mxu0
    %v99 = vadd.f32 %v29, %v93
    %v100 = vadd.f32 %v30, %v96
    %101 = vst.msk [vmem:[#allocation2] sm:$0xff] %vm54, %v99
    %102 = vst.msk [vmem:[#allocation2 + $0x8] sm:$0xff] %vm54, %v100
    // Predicated region
    $region26: #{tpu_custom_call.1} parent=1 // pred_check
      %p103 = pneg %p22
    $region27: #{tpu_custom_call.1} parent=1 // pred_check_branch
      %105 = sbr.rel (%p103) target = $region29
    $region28: #{tpu_custom_call.1} parent=1 // pred_region
      %v106 = vld [vmem:[%s3] sm:$0xf]
      %v107 = vld [vmem:[%s3 + $0x4] sm:$0xf]
      %v108 = vld [vmem:[%s4] sm:$0xf]
      %v109 = vld [vmem:[%s4 + $0x4] sm:$0xf]
      %v110 = vld [vmem:[%s4 + $0x8] sm:$0xf]
      %v111 = vld [vmem:[%s4 + $0xc] sm:$0xf]
      %v112 = vld [vmem:[%s4 + $0x10] sm:$0xf]
      %v113 = vld [vmem:[%s4 + $0x14] sm:$0xf]
      %v114 = vld [vmem:[%s4 + $0x18] sm:$0xf]
      %v115 = vld [vmem:[%s4 + $0x1c] sm:$0xf]
      %v116 = vld [vmem:[%s4 + $0x20] sm:$0xf]
      %v117 = vld [vmem:[%s4 + $0x24] sm:$0xf]
      %v118 = vld [vmem:[%s4 + $0x28] sm:$0xf]
      %v119 = vld [vmem:[%s4 + $0x2c] sm:$0xf]
      %v120 = vld [vmem:[%s4 + $0x30] sm:$0xf]
      %v121 = vld [vmem:[%s4 + $0x34] sm:$0xf]
      %v122 = vld [vmem:[%s4 + $0x38] sm:$0xf]
      %v123 = vld [vmem:[%s4 + $0x3c] sm:$0xf]
      %v126 = vunpack.c.l.b16 %v106
      %v127 = vunpack.c.l.b16 %v107
      %v128 = vpack.c.b16 %v127, %v126
      %v146 = vunpack.c.l.b16 %v108
      %v147 = vunpack.c.l.b16 %v109
      %v148 = vunpack.c.l.b16 %v110
      %v149 = vunpack.c.l.b16 %v111
      %v150 = vunpack.c.l.b16 %v112
      %v151 = vunpack.c.l.b16 %v113
      %v152 = vunpack.c.l.b16 %v114
      %v153 = vunpack.c.l.b16 %v115
      %v154 = vunpack.c.l.b16 %v116
      %v155 = vunpack.c.l.b16 %v117
      %v156 = vunpack.c.l.b16 %v118
      %v157 = vunpack.c.l.b16 %v119
      %v158 = vunpack.c.l.b16 %v120
      %v159 = vunpack.c.l.b16 %v121
      %v160 = vunpack.c.l.b16 %v122
      %v161 = vunpack.c.l.b16 %v123
      %v162 = vpack.c.b16 %v147, %v146
      %v163 = vpack.c.b16 %v149, %v148
      %v164 = vpack.c.b16 %v151, %v150
      %v165 = vpack.c.b16 %v153, %v152
      %v166 = vpack.c.b16 %v155, %v154
      %v167 = vpack.c.b16 %v157, %v156
      %v168 = vpack.c.b16 %v159, %v158
      %v169 = vpack.c.b16 %v161, %v160
      %178 = vmatprep.subr.bf16.mxu0 0
      %179 = vmatpush1.bf16.msra.mxu0 %v169
      %180 = vmatprep.subr.bf16.mxu0 0
      %181 = vmatpush1.bf16.msra.mxu0 %v168
      %182 = vmatprep.subr.bf16.mxu0 0
      %183 = vmatpush1.bf16.msra.mxu0 %v167
      %184 = vmatprep.subr.bf16.mxu0 0
      %185 = vmatpush1.bf16.msra.mxu0 %v166
      %186 = vmatprep.subr.bf16.mxu0 0
      %187 = vmatpush1.bf16.msra.mxu0 %v165
      %188 = vmatprep.subr.bf16.mxu0 0
      %189 = vmatpush1.bf16.msra.mxu0 %v164
      %190 = vmatprep.subr.bf16.mxu0 0
      %191 = vmatpush1.bf16.msra.mxu0 %v163
      %192 = vmatprep.subr.bf16.mxu0 0
      %193 = vmatpush1.bf16.msra.mxu0 %v162
      %194 = vmatprep.subr.bf16.mxu0 0
      %195 = vmatpush2.bf16.msra.mxu0 0
      %196 = vmatprep.subr.bf16.mxu0 0
      %197 = vmatpush2.bf16.msra.mxu0 0
      %198 = vmatprep.subr.bf16.mxu0 0
      %199 = vmatpush2.bf16.msra.mxu0 0
      %200 = vmatprep.subr.bf16.mxu0 0
      %201 = vmatpush2.bf16.msra.mxu0 0
      %202 = vmatprep.subr.bf16.mxu0 0
      %203 = vmatpush2.bf16.msra.mxu0 0
      %204 = vmatprep.subr.bf16.mxu0 0
      %205 = vmatpush2.bf16.msra.mxu0 0
      %206 = vmatprep.subr.bf16.mxu0 0
      %207 = vmatpush2.bf16.msra.mxu0 0
      %208 = vmatprep.subr.bf16.mxu0 0
      %209 = vmatpush2.bf16.msra.mxu0 0
      %210 = vmatprep.mubr.bf16.mxu0 0
      %211 = vmatmul.mubr.bf16.gmra.mxu0 %v128
      %v212 = vpop.f32.mrf.mxu0
      %v213 = vadd.f32 0.0, %v212
      %v214 = vpop.f32.mrf.mxu0
      %v215 = vpop.f32.mrf.mxu0
      %v216 = vadd.f32 0.0, %v215
      %v217 = vpop.f32.mrf.mxu0
      %218 = vdwg.mxu0
      %v219 = vld [vmem:[#allocation2] sm:$0xff]
      %v220 = vld [vmem:[#allocation2 + $0x8] sm:$0xff]
      %v221 = vld [vmem:[%s2] sm:$0x1]
      %v223 = vlaneseq
      %v224 = vshrl.u32 %v223, 7
      %v225 = vsub.s32 0, %v224
      %v226 = vrot.slane %v221, %v225
      %v228 = vadd.f32 %v219, %v226
      %v229 = vadd.f32 %v220, %v226
      %v230 = vadd.f32 %v228, %v213
      %v231 = vadd.f32 %v229, %v216
      %232 = vst.msk [vmem:[#allocation3] sm:$0xff] %vm54, %v230
      %233 = vst.msk [vmem:[#allocation3 + $0x8] sm:$0xff] %vm54, %v231
    $region29: #{tpu_custom_call.1} parent=1 // pred_fallthru
      _
    // Predicated region
    $region30: #{tpu_custom_call.1} parent=1 // pred_check
      _
    $region31: #{tpu_custom_call.1} parent=1 // pred_check_branch
      %235 = sbr.rel (0) target = $region33
    $region32: #{tpu_custom_call.1} parent=1 // pred_region
      %s237 = ssub.s32 256, 256
      %238 = vsyncadd [#allocation4], %s237
      %s239 = sshll.u32 [#allocation3], 4
      %s240 = int_to_ptr.vmem [resolvable:$true] %s239
      %245 = dma.vmem_to_hbm [thread:$0]  %s240, 256, %s5, [#allocation4], 128, 128, 8
    $region33: #{tpu_custom_call.1} parent=1 // pred_fallthru
      _
    // Predicated region
    $region34: #{tpu_custom_call.1} parent=1 // pred_check
      _
    $region35: #{tpu_custom_call.1} parent=1 // pred_check_branch
      %247 = sbr.rel (0) target = $region37
    $region36: #{tpu_custom_call.1} parent=1 // pred_region
      %248 = dma.done [#allocation4], 256
    $region37: #{tpu_custom_call.1} parent=1 // pred_fallthru
      _
    %249 = vsyncpa [#allocation4], 1

</llo_original>
